<compile_context>
chip_gen: v6e
topology: v6e:2x2x1
jax: 0.10.0
libtpu: 0.0.40
codegen_flags: <defaults>
</compile_context>

<pallas_src>
import math
from functools import partial

import jax
import jax.numpy as jnp
from jax import lax
from jax.experimental import pallas as pl
from jax.experimental.pallas import tpu as pltpu

_MiB = 1024 * 1024


def _round_up(a: int, m: int) -> int:
    return (a + m - 1) // m * m


def _sublane_pack(dtype) -> int:
    # Rows pack along sublanes: f32 -> 8, bf16/f16 -> 16, int8/fp8 -> 32.
    return max(8, 32 // jnp.dtype(dtype).itemsize)


def _pick_bb(B: int, pack: int, max_bb: int) -> int:
    """Batch rows per block: whole batch if small, else a pack-aligned divisor of B."""
    max_bb = max(pack, (max_bb // pack) * pack)
    if B <= max_bb:
        return B                                # block dim == full dim: always legal
    for d in range(max_bb, pack - 1, -pack):    # largest pack-aligned divisor of B
        if B % d == 0:
            return d
    if B <= 4 * max_bb:                         # modest batch: take it whole, no pad
        return B
    return max_bb                               # rare fallback: batch gets padded


def _pick_tn(Nf: int, max_tn: int) -> int:
    """Feature columns per block. Nf is a multiple of 128 and Nf > max_tn."""
    max_tn = max(128, (max_tn // 128) * 128)
    m = Nf // 128
    tn = 128
    for d in range(max_tn // 128, 0, -1):       # largest 128-multiple divisor of Nf
        if m % d == 0:
            tn = d * 128
            break
    if tn * 8 < max_tn:                         # pathological divisor: accept padding
        tn = max_tn
    return tn


def _drop_path_kernel(x_ref, s_ref, o_ref):
    # y = x * per-sample scale (0 or 1/keep_prob), broadcast across the lane axis.
    # s_ref is (bb, 1) in x.dtype, so the multiply stays in the input dtype.
    o_ref[...] = x_ref[...] * s_ref[...]


def _scale_rows_pallas(xf, scale, bb, tn):
    Bp, Np = xf.shape
    grid = (Bp // bb, Np // tn)
    tile_bytes = bb * tn * jnp.dtype(xf.dtype).itemsize
    # x (double-buffered) + out (double-buffered) + tiny scale, with headroom.
    # Safe on v5e/v6e (128 MiB physical) and v7x (64 MiB physical).
    vmem_limit = int(min(48 * _MiB, max(24 * _MiB, 4 * tile_bytes + 2 * _MiB)))
    return pl.pallas_call(
        _drop_path_kernel,
        out_shape=jax.ShapeDtypeStruct((Bp, Np), xf.dtype),
        grid=grid,
        in_specs=[pl.BlockSpec((bb, tn), lambda i, j: (i, j)),
                  pl.BlockSpec((bb, 1), lambda i, j: (i, 0))],
        out_specs=pl.BlockSpec((bb, tn), lambda i, j: (i, j)),
        compiler_params=pltpu.CompilerParams(
            dimension_semantics=("parallel", "parallel"),
            vmem_limit_bytes=vmem_limit),
    )(xf, scale)


@partial(jax.custom_vjp, nondiff_argnums=(2, 3))
def _scale_rows(xf, scale, bb, tn):
    return _scale_rows_pallas(xf, scale, bb, tn)


def _scale_rows_fwd(xf, scale, bb, tn):
    return _scale_rows_pallas(xf, scale, bb, tn), scale


def _scale_rows_bwd(bb, tn, scale, g):
    # d/dx (x * scale) = scale; the mask is non-differentiable (stop_gradient'ed).
    return _scale_rows_pallas(g, scale, bb, tn), jnp.zeros_like(scale)


_scale_rows.defvjp(_scale_rows_fwd, _scale_rows_bwd)


def drop_path(x, drop_prob: float = 0.0, *, training: bool = False, seed: int = 0,
              block_b: int = 64, block_n: int = 16384,
              max_tile_bytes: int = 4 * _MiB):
    """Pallas TPU equivalent of the PyTorch drop_path() forward."""
    if drop_prob == 0.0 or not training:
        return x                                # identity path, same as PyTorch
    if not 0.0 <= drop_prob < 1.0:
        raise ValueError(f"invalid drop_prob={drop_prob}")
    keep_prob = 1.0 - drop_prob

    orig_shape = x.shape
    B = orig_shape[0]
    N = int(math.prod(orig_shape[1:])) if x.ndim > 1 else 1
    xf = x.reshape(B, N)

    itemsize = jnp.dtype(x.dtype).itemsize
    pack = _sublane_pack(x.dtype)
    bb = _pick_bb(B, pack, block_b)

    # Feature tile (lane axis): sized so one buffer is ~max_tile_bytes, divisor-aware
    # to avoid pad/slice passes over the tensor.
    tn_cap = max(128, min(int(block_n), max_tile_bytes // max(1, bb * itemsize)))
    if N <= tn_cap:
        tn, Np = N, N                           # full feature dim per block: no padding
    else:
        tn = _pick_tn(_round_up(N, 128), tn_cap)
        Np = _round_up(N, tn)
    Bp = _round_up(B, bb)

    # Per-sample Bernoulli(keep_prob) mask, generated ONCE in the wrapper (tiny: B
    # values), so the kernel body is a pure stream multiply. Scale is held in x.dtype
    # (matches PyTorch's in-dtype division; keeps the VPU in bf16 on v6e/v7x).
    key = jax.random.PRNGKey(seed)
    keep = jax.random.bernoulli(key, p=keep_prob, shape=(B,))
    scale = lax.stop_gradient(
        (keep.astype(jnp.float32) * jnp.float32(1.0 / keep_prob)).astype(x.dtype)
    ).reshape(B, 1)

    pad_b, pad_n = Bp - B, Np - N
    if pad_b or pad_n:                          # rare with divisor-aware tiling
        xf = jnp.pad(xf, ((0, pad_b), (0, pad_n)))
    if pad_b:
        scale = jnp.pad(scale, ((0, pad_b), (0, 0)))

    out = _scale_rows(xf, scale, bb, tn)

    if pad_b or pad_n:
        out = out[:B, :N]
    return out.reshape(orig_shape)


class DropPath:
    """Drop paths (Stochastic Depth) per sample — mirrors the nn.Module interface."""

    def __init__(self, drop_prob=None):
        self.drop_prob = float(drop_prob) if drop_prob is not None else 0.0
        self.training = True

    def __call__(self, x, *, seed: int = 0):
        return drop_path(x, self.drop_prob, training=self.training, seed=seed)


if __name__ == "__main__":
    key = jax.random.PRNGKey(0)
    x = jax.random.normal(key, (2, 4, 16, 16), dtype=jnp.float32)

    # 1) Eval / zero-prob path is the identity (matches PyTorch early return).
    y_eval = jax.block_until_ready(drop_path(x, drop_prob=0.1, training=False))
    assert jnp.array_equal(y_eval, x)

    # 2) Training path: each sample is either all-zero or x / keep_prob.
    drop_prob = 0.5
    keep_prob = 1.0 - drop_prob
    y = jax.block_until_ready(drop_path(x, drop_prob, training=True, seed=1234))
    assert y.shape == x.shape
    yf = y.reshape(x.shape[0], -1)
    xs = x.reshape(x.shape[0], -1) / keep_prob
    for b in range(x.shape[0]):
        dropped = bool(jnp.all(yf[b] == 0.0))
        kept = bool(jnp.allclose(yf[b], xs[b], atol=1e-6, rtol=1e-6))
        assert dropped or kept, f"sample {b}: neither dropped nor x/keep_prob"

    # 3) Deterministic given the same seed.
    y2 = jax.block_until_ready(drop_path(x, drop_prob, training=True, seed=1234))
    assert jnp.array_equal(y, y2)

    # 4) Statistical sanity on a larger batch (exercises multi-block batch grid).
    xb = jax.random.normal(jax.random.PRNGKey(1), (512, 256), dtype=jnp.float32)
    yb = jax.block_until_ready(drop_path(xb, 0.3, training=True, seed=7))
    kept_frac = float(jnp.mean(jnp.any(yb != 0.0, axis=1)))
    assert 0.5 < kept_frac < 0.9, f"keep fraction {kept_frac} far from 0.7"

    # 5) bf16 path: multiply stays in input dtype.
    xh = x.astype(jnp.bfloat16)
    yh = jax.block_until_ready(drop_path(xh, 0.25, training=True, seed=11))
    assert yh.dtype == jnp.bfloat16 and yh.shape == xh.shape

    # 6) Gradient flows through the custom VJP (per-row grad is 0 or 1/keep_prob).
    g = jax.grad(lambda z: jnp.sum(drop_path(z, drop_prob, training=True, seed=1234)))(x)
    gf = g.reshape(x.shape[0], -1)
    for b in range(x.shape[0]):
        ok = bool(jnp.all(gf[b] == 0.0)) or bool(jnp.allclose(gf[b], 1.0 / keep_prob))
        assert ok, f"sample {b}: unexpected gradient"

    # Module-style usage (same kernel underneath).
    m = DropPath(drop_prob=0.2)
    _ = jax.block_until_ready(m(x, seed=42))

    print("KERNEL_OK")
</pallas_src>

<mosaic_0001>
module attributes {stable_mosaic.version = 11 : i64} {
  func.func @_drop_path_kernel(%arg0: i32, %arg1: i32, %arg2: memref<2x1024xf32, #tpu.memory_space<vmem>>, %arg3: memref<2x1xf32, #tpu.memory_space<vmem>>, %arg4: memref<2x1024xf32, #tpu.memory_space<vmem>>) attributes {dimension_semantics = [#tpu.dimension_semantics<parallel>, #tpu.dimension_semantics<parallel>], iteration_bounds = array<i64: 1, 1>, scalar_prefetch = 0 : i64, scratch_operands = 0 : i64, tpu.core_type = #tpu.core_type<tc>, window_params = [{transform_indices = @transform_0, window_bounds = array<i64: 2, 1024>}, {transform_indices = @transform_1, window_bounds = array<i64: 2, 1>}, {transform_indices = @transform_2, window_bounds = array<i64: 2, 1024>}]} {
    %c0 = arith.constant 0 : index
    %c0_0 = arith.constant 0 : index
    %0 = vector.load %arg2[%c0, %c0_0] : memref<2x1024xf32, #tpu.memory_space<vmem>>, vector<2x1024xf32>
    %c0_1 = arith.constant 0 : index
    %c0_2 = arith.constant 0 : index
    %1 = vector.load %arg3[%c0_1, %c0_2] : memref<2x1xf32, #tpu.memory_space<vmem>>, vector<2x1xf32>
    %2 = vector.broadcast %1 : vector<2x1xf32> to vector<2x1024xf32>
    %3 = arith.mulf %0, %2 : vector<2x1024xf32>
    %c0_3 = arith.constant 0 : index
    %c0_4 = arith.constant 0 : index
    %4 = vector.load %arg4[%c0_3, %c0_4] : memref<2x1024xf32, #tpu.memory_space<vmem>>, vector<2x1024xf32>
    tpu.vector_store %arg4[%c0_3, %c0_4], %3 {strides = array<i32>} : memref<2x1024xf32, #tpu.memory_space<vmem>>, vector<2x1024xf32>,
    return
  }
  func.func @transform_0(%arg0: i32, %arg1: i32) -> (i32, i32) {
    %c0_i32 = arith.constant 0 : i32
    return %arg0, %arg1 : i32, i32
  }
  func.func @transform_1(%arg0: i32, %arg1: i32) -> (i32, i32) {
    %c0_i32 = arith.constant 0 : i32
    %c0_i32_0 = arith.constant 0 : i32
    return %arg0, %c0_i32 : i32, i32
  }
  func.func @transform_2(%arg0: i32, %arg1: i32) -> (i32, i32) {
    %c0_i32 = arith.constant 0 : i32
    return %arg0, %arg1 : i32, i32
  }
}

</mosaic_0001>

<llo_original>
// kernel: tpu_custom_call.1
$region0: #{tpu_custom_call.1}
  #allocation0 [shape = 'u32[]', space=smem, size = 0x4, offset = 0x4, fixed_abs, tag = 'smem constant byte address 0x4 - core index']
  #allocation1 [shape = 'u32[144,128]{1,0:T(1,128)}', space=vmem, size = 0x12000, scoped, tag = 'internal scratch']
  %s0 = inlined_call_operand.hbm [shape: f32[2,1024], index: 0, kind: input, shape index: {}]
  %s1 = inlined_call_operand.vmem [shape: f32[2,1], index: 1, kind: input, shape index: {}]
  %s2 = inlined_call_operand.hbm [shape: f32[2,1024], index: 2, kind: output, shape index: {}]
  %s3 = sld [smem:[#allocation0]]
  $region22: #{tpu_custom_call.1} parent=0
    _
  %s5 = ssub.s32 1, %s3
  %s6 = scalar_select 0, %s5, %s3
  $region1: #{tpu_custom_call.1} parent=0
    #allocation2 [shape = 'u8[8192]{0}', space=vmem, size = 0x2000, scoped, tag = 'input window, operand 0, single buffered']
    #allocation3 [shape = 's32[1]{0}', space=sflag, size = 0x4, scoped, tag = 'scoped memory for tpu_custom_call.1']
    #allocation4 [shape = 's32[1]{0}', space=sflag, size = 0x4, scoped, tag = 'scoped memory for tpu_custom_call.1']
    #allocation5 [shape = 'u8[8192]{0}', space=vmem, size = 0x2000, scoped, tag = 'output window, operand 0, single buffered']
    %7 = vsyncpa [#allocation3], 0
    %8 = vsyncpa [#allocation4], 0
    // Predicated region
    $region2: #{tpu_custom_call.1} parent=1 // pred_check
      _
    $region3: #{tpu_custom_call.1} parent=1 // pred_check_branch
      %10 = sbr.rel (0) target = $region5
    $region4: #{tpu_custom_call.1} parent=1 // pred_region
      %s12 = ssub.s32 256, 256
      %13 = vsyncadd [#allocation3], %s12
      %s15 = sshll.u32 [#allocation2], 4
      %s16 = int_to_ptr.vmem [resolvable:$true] %s15
      %18 = dma.hbm_to_vmem [thread:$0]  %s0, 256, %s16, [#allocation3]
    $region5: #{tpu_custom_call.1} parent=1 // pred_fallthru
      _
    // Predicated region
    $region6: #{tpu_custom_call.1} parent=1 // pred_check
      _
    $region7: #{tpu_custom_call.1} parent=1 // pred_check_branch
      %20 = sbr.rel (0) target = $region9
    $region8: #{tpu_custom_call.1} parent=1 // pred_region
      _
    $region9: #{tpu_custom_call.1} parent=1 // pred_fallthru
      _
    // Predicated region
    $region10: #{tpu_custom_call.1} parent=1 // pred_check
      _
    $region11: #{tpu_custom_call.1} parent=1 // pred_check_branch
      %22 = sbr.rel (0) target = $region13
    $region12: #{tpu_custom_call.1} parent=1 // pred_region
      %23 = dma.done [#allocation3], 256
    $region13: #{tpu_custom_call.1} parent=1 // pred_fallthru
      _
    %v24 = vld [vmem:[#allocation2] sm:$0xff]
    %v25 = vld [vmem:[#allocation2 + $0x8] sm:$0xff]
    %v26 = vld [vmem:[%s1] sm:$0x3]
    %28 = vset.pattern.permute.xlu0 0
    %29 = vperm.xlu0 %28, %v26
    %v30 = vpop.permute.xlu0 %29
    %v32 = vunpack.c.l.s4 269488144
    %v33 = vunpack.c.0.s8 %v32
    %v34 = vlaneseq
    %v35 = vshrl.u32 %v34, 7
    %v36 = vsub.s32 %v33, %v35
    %v37 = vrot.slane %v30, %v36
    %v39 = vmul.f32 %v24, %v37
    %v40 = vmul.f32 %v25, %v37
    %41 = vst [vmem:[#allocation5] sm:$0xff] %v39
    %42 = vst [vmem:[#allocation5 + $0x8] sm:$0xff] %v40
    // Predicated region
    $region14: #{tpu_custom_call.1} parent=1 // pred_check
      _
    $region15: #{tpu_custom_call.1} parent=1 // pred_check_branch
      %44 = sbr.rel (0) target = $region17
    $region16: #{tpu_custom_call.1} parent=1 // pred_region
      %s46 = ssub.s32 256, 256
      %47 = vsyncadd [#allocation4], %s46
      %s49 = sshll.u32 [#allocation5], 4
      %s50 = int_to_ptr.vmem [resolvable:$true] %s49
      %52 = dma.vmem_to_hbm [thread:$0]  %s50, 256, %s2, [#allocation4]
    $region17: #{tpu_custom_call.1} parent=1 // pred_fallthru
      _
    // Predicated region
    $region18: #{tpu_custom_call.1} parent=1 // pred_check
      _
    $region19: #{tpu_custom_call.1} parent=1 // pred_check_branch
      %54 = sbr.rel (0) target = $region21
    $region20: #{tpu_custom_call.1} parent=1 // pred_region
      %55 = dma.done [#allocation4], 256
    $region21: #{tpu_custom_call.1} parent=1 // pred_fallthru
      _
    %56 = vsyncpa [#allocation3], 1
    %57 = vsyncpa [#allocation4], 1

</llo_original>
